<compile_context>
chip_gen: v5e
topology: v5e:2x2
jax: 0.10.0
libtpu: 0.0.40
codegen_flags: <defaults>
</compile_context>

<pallas_src>
import jax
import jax.numpy as jnp
from jax.experimental import pallas as pl
from jax.experimental.pallas import tpu as pltpu


def _memory_kernel(x_ref, w_ref, b_ref, mem_ref, o_ref):
    # x_ref:   (1, C, TL)  pixel tile, channels-first (pixels on lanes)
    # w_ref:   (O, C)      BN-folded 1x1-conv weight   (matmul dtype)
    # b_ref:   (O, 1)      BN-folded bias              (f32)
    # mem_ref: (K, O)      scale * memory[:, 0, :]     (matmul dtype)
    # o_ref:   (1, K, TL)  softmax(sim_map) for this tile (f32)
    x = x_ref[0]                                                      # (C, TL)

    # S(feats): Conv1d(k=1) + folded BatchNorm1d + ReLU   -> (O, TL)
    y = jnp.dot(w_ref[...], x, preferred_element_type=jnp.float32)
    y = jnp.maximum(y + b_ref[...], 0.0)

    # sim_map = (scale * memory) @ feats_m                -> (K, TL)
    s = jnp.dot(mem_ref[...], y.astype(mem_ref.dtype),
                preferred_element_type=jnp.float32)

    # Softmax over classes (sublane axis).  Pixels (lanes) are independent, so
    # any garbage in a ragged edge tile's padded lanes stays in those lanes and
    # is dropped by the masked edge-block writeback.
    s = s - jnp.max(s, axis=0, keepdims=True)
    e = jnp.exp(s)
    # approx=True reciprocal would move the divide onto the EUP but loosens the
    # match vs the f32 reference beyond 1e-5; keep exact here.
    p = e * pl.reciprocal(jnp.sum(e, axis=0, keepdims=True), approx=False)

    o_ref[0] = p


def memory_forward(feats, conv_w, conv_b, bn_gamma, bn_beta, bn_mean, bn_var,
                   memory, *, eps=1e-5, tile_l=1024,
                   matmul_dtype=jnp.float32):
    """feats: (B, C, H, W) float32 (PyTorch NCHW convention)."""
    B, C, H, W = feats.shape
    O = conv_w.shape[0]
    K = memory.shape[0]
    L = H * W

    # The PyTorch module matmuls feats_m (B, L, O) against memory^T (C, K);
    # that only type-checks when out_channels == feats_channels.
    assert O == C, "Memory.forward requires out_channels == feats_channels"

    # ---- glue: fold BN (inference mode) into the 1x1 conv --------------------
    inv_std = 1.0 / jnp.sqrt(bn_var + eps)                      # (O,)
    w2d = conv_w[:, :, 0]                                       # (O, C)
    w_eff = (bn_gamma * inv_std)[:, None] * w2d                 # (O, C)
    b_eff = bn_beta + bn_gamma * inv_std * (conv_b - bn_mean)   # (O,)

    # ---- glue: channels-first layout, scale folded into memory ---------------
    scale = float(C) ** -0.5
    x = feats.reshape(B, C, L).astype(matmul_dtype)             # (B, C, L) — no transpose
    w_in = w_eff.astype(matmul_dtype)                           # (O, C)
    b_col = b_eff.reshape(O, 1).astype(jnp.float32)             # (O, 1)
    # Only memory[:, 0, :] is used (faithful to the PyTorch forward, which
    # ignores num_feats_per_cls > 1 in forward()).
    mem_s = (scale * memory[:, 0, :]).astype(matmul_dtype)      # (K, O)

    # Big pixel tiles amortize per-grid-step overhead; keep the block lane dim
    # a multiple of 128 (or the full L) so blocks satisfy the (8,128) layout
    # rule.  Ragged last tile (L % tile_l != 0) is handled by Pallas edge
    # masking instead of an assert.
    if L <= tile_l:
        tile_l = L
    else:
        tile_l = max(128, (tile_l // 128) * 128)
    grid_l = pl.cdiv(L, tile_l)

    itemsize = jnp.dtype(matmul_dtype).itemsize
    cost = pl.CostEstimate(
        flops=2 * B * L * (O * C + K * O),
        transcendentals=B * L * K,
        bytes_accessed=(B * C * L * itemsize          # activations in
                        + B * K * L * 4               # softmax out (f32)
                        + (O * C + K * O) * itemsize  # weights + memory
                        + O * 4))                     # bias

    out = pl.pallas_call(
        _memory_kernel,
        out_shape=jax.ShapeDtypeStruct((B, K, L), jnp.float32),
        grid_spec=pltpu.PrefetchScalarGridSpec(
            num_scalar_prefetch=0,
            grid=(B, grid_l),
            in_specs=[
                pl.BlockSpec((1, C, tile_l), lambda b, l: (b, 0, l)),   # x tile
                pl.BlockSpec((O, C), lambda b, l: (0, 0)),              # folded weight
                pl.BlockSpec((O, 1), lambda b, l: (0, 0)),              # folded bias
                pl.BlockSpec((K, O), lambda b, l: (0, 0)),              # scaled memory
            ],
            out_specs=pl.BlockSpec((1, K, tile_l), lambda b, l: (b, 0, l)),
        ),
        compiler_params=pltpu.CompilerParams(
            dimension_semantics=("parallel", "parallel"),
            # Explicit scoped-VMEM budget: v7x has only 64 MiB physical VMEM
            # (v5e/v6e: 128 MiB with 16/32 MiB default scoped); 48 MiB leaves
            # headroom for compiler scratch on every generation while allowing
            # tile_l in the 512-2048 range at realistic C/K sizes.
            vmem_limit_bytes=48 * 1024 * 1024),
        cost_estimate=cost,
    )(x, w_in, b_col, mem_s)

    # memory_output = sim_map.permute(0,2,1).reshape(B, K, H, W): with the
    # (B, K, L) kernel output this is a free reshape (no HBM transpose).
    return out.reshape(B, K, H, W)


def _reference(feats, conv_w, conv_b, bn_gamma, bn_beta, bn_mean, bn_var,
               memory, eps=1e-5):
    B, C, H, W = feats.shape
    x = feats.reshape(B, C, H * W)                                   # (B,C,L)
    y = jnp.einsum("oc,bcl->bol", conv_w[:, :, 0], x) + conv_b[None, :, None]
    y = (y - bn_mean[None, :, None]) / jnp.sqrt(bn_var + eps)[None, :, None]
    y = y * bn_gamma[None, :, None] + bn_beta[None, :, None]
    y = jnp.maximum(y, 0.0)
    y = y.transpose(0, 2, 1)                                         # (B,L,O)
    mem = memory[:, 0, :]                                            # (K,C)
    sim = (float(C) ** -0.5) * jnp.einsum("blo,ko->blk", y, mem)
    sim = jax.nn.softmax(sim, axis=-1)
    return sim.transpose(0, 2, 1).reshape(B, memory.shape[0], H, W)


if __name__ == "__main__":
    # Module config (small, matmul-compatible: out_channels == feats_channels)
    num_classes = 8
    feats_channels = 32
    out_channels = 32
    num_feats_per_cls = 1
    B, H, W = 2, 16, 16

    key = jax.random.PRNGKey(0)
    ks = jax.random.split(key, 8)

    feats = jax.random.normal(ks[0], (B, feats_channels, H, W), jnp.float32)

    # Deterministic parameter init (shapes from Memory.__init__)
    conv_w = jax.random.normal(ks[1], (out_channels, feats_channels, 1),
                               jnp.float32) * 0.1
    conv_b = jax.random.normal(ks[2], (out_channels,), jnp.float32) * 0.1
    bn_gamma = 1.0 + 0.1 * jax.random.normal(ks[3], (out_channels,), jnp.float32)
    bn_beta = 0.1 * jax.random.normal(ks[4], (out_channels,), jnp.float32)
    bn_mean = 0.1 * jax.random.normal(ks[5], (out_channels,), jnp.float32)
    bn_var = 1.0 + 0.1 * jax.random.uniform(ks[6], (out_channels,), jnp.float32)
    # memory is zeros in __init__; use random values so the softmax is non-trivial
    memory = jax.random.normal(
        ks[7], (num_classes, num_feats_per_cls, feats_channels), jnp.float32)

    ref = _reference(feats, conv_w, conv_b, bn_gamma, bn_beta,
                     bn_mean, bn_var, memory)

    # f32 path: bit-faithful (within f32 rounding) to the PyTorch module.
    out = memory_forward(feats, conv_w, conv_b, bn_gamma, bn_beta,
                         bn_mean, bn_var, memory)
    out = jax.block_until_ready(out)
    assert out.shape == (B, num_classes, H, W)
    assert jnp.allclose(out, ref, atol=1e-5, rtol=1e-5)

    # bf16 matmul-input path (recommended on v6e/v7x: bf16-native MXU, half the
    # activation DMA bytes); bias/ReLU/softmax stay in f32.
    out_bf16 = memory_forward(feats, conv_w, conv_b, bn_gamma, bn_beta,
                              bn_mean, bn_var, memory,
                              matmul_dtype=jnp.bfloat16)
    out_bf16 = jax.block_until_ready(out_bf16)
    assert jnp.allclose(out_bf16, ref, atol=2e-2, rtol=2e-2)

    print("KERNEL_OK")
</pallas_src>

<mosaic_0001>
module attributes {stable_mosaic.version = 11 : i64} {
  func.func @_memory_kernel(%arg0: i32, %arg1: i32, %arg2: memref<1x32x256xf32, #tpu.memory_space<vmem>>, %arg3: memref<32x32xf32, #tpu.memory_space<vmem>>, %arg4: memref<32x1xf32, #tpu.memory_space<vmem>>, %arg5: memref<8x32xf32, #tpu.memory_space<vmem>>, %arg6: memref<1x8x256xf32, #tpu.memory_space<vmem>>) attributes {dimension_semantics = [#tpu.dimension_semantics<parallel>, #tpu.dimension_semantics<parallel>], iteration_bounds = array<i64: 2, 1>, scalar_prefetch = 0 : i64, scratch_operands = 0 : i64, tpu.core_type = #tpu.core_type<tc>, window_params = [{transform_indices = @transform_0, window_bounds = array<i64: 1, 32, 256>}, {pipeline_mode = #tpu.pipeline_mode<synchronous>, transform_indices = @transform_1, window_bounds = array<i64: 32, 32>}, {pipeline_mode = #tpu.pipeline_mode<synchronous>, transform_indices = @transform_2, window_bounds = array<i64: 32, 1>}, {pipeline_mode = #tpu.pipeline_mode<synchronous>, transform_indices = @transform_3, window_bounds = array<i64: 8, 32>}, {transform_indices = @transform_4, window_bounds = array<i64: 1, 8, 256>}]} {
    %c0 = arith.constant 0 : index
    %c0_0 = arith.constant 0 : index
    %c0_1 = arith.constant 0 : index
    %0 = vector.load %arg2[%c0, %c0_0, %c0_1] : memref<1x32x256xf32, #tpu.memory_space<vmem>>, vector<1x32x256xf32>
    %1 = vector.shape_cast %0 : vector<1x32x256xf32> to vector<32x256xf32>
    %c0_2 = arith.constant 0 : index
    %c0_3 = arith.constant 0 : index
    %2 = vector.load %arg3[%c0_2, %c0_3] : memref<32x32xf32, #tpu.memory_space<vmem>>, vector<32x32xf32>
    %cst = arith.constant dense<0.000000e+00> : vector<32x256xf32>
    %3 = tpu.matmul %2, %1, %cst {dimension_numbers = #tpu.dot_dimension_numbers<[1], [0], [0], [1], [0, 0, 1, 1], [], []>} : vector<32x32xf32>, vector<32x256xf32>, vector<32x256xf32> -> vector<32x256xf32>
    %c0_4 = arith.constant 0 : index
    %c0_5 = arith.constant 0 : index
    %4 = vector.load %arg4[%c0_4, %c0_5] : memref<32x1xf32, #tpu.memory_space<vmem>>, vector<32x1xf32>
    %5 = vector.broadcast %4 : vector<32x1xf32> to vector<32x256xf32>
    %6 = arith.addf %3, %5 : vector<32x256xf32>
    %cst_6 = arith.constant 0.000000e+00 : f32
    %7 = vector.broadcast %cst_6 : f32 to vector<32x256xf32>
    %8 = arith.maximumf %6, %7 : vector<32x256xf32>
    %c0_7 = arith.constant 0 : index
    %c0_8 = arith.constant 0 : index
    %9 = vector.load %arg5[%c0_7, %c0_8] : memref<8x32xf32, #tpu.memory_space<vmem>>, vector<8x32xf32>
    %cst_9 = arith.constant dense<0.000000e+00> : vector<8x256xf32>
    %10 = tpu.matmul %9, %8, %cst_9 {dimension_numbers = #tpu.dot_dimension_numbers<[1], [0], [0], [1], [0, 0, 1, 1], [], []>} : vector<8x32xf32>, vector<32x256xf32>, vector<8x256xf32> -> vector<8x256xf32>
    %cst_10 = arith.constant dense<0xFF800000> : vector<256xf32>
    %11 = vector.multi_reduction <maximumf>, %10, %cst_10 [0] : vector<8x256xf32> to vector<256xf32>
    %12 = vector.shape_cast %11 : vector<256xf32> to vector<1x256xf32>
    %13 = vector.broadcast %12 : vector<1x256xf32> to vector<8x256xf32>
    %14 = arith.subf %10, %13 : vector<8x256xf32>
    %15 = math.exp %14 : vector<8x256xf32>
    %cst_11 = arith.constant dense<0.000000e+00> : vector<256xf32>
    %16 = vector.multi_reduction <add>, %15, %cst_11 [0] : vector<8x256xf32> to vector<256xf32>
    %17 = vector.shape_cast %16 : vector<256xf32> to vector<1x256xf32>
    %18 = tpu.reciprocal %17 : vector<1x256xf32> -> vector<1x256xf32>
    %19 = vector.broadcast %18 : vector<1x256xf32> to vector<8x256xf32>
    %20 = arith.mulf %15, %19 : vector<8x256xf32>
    %c0_12 = arith.constant 0 : index
    %c0_13 = arith.constant 0 : index
    %c0_14 = arith.constant 0 : index
    %21 = vector.load %arg6[%c0_12, %c0_13, %c0_14] : memref<1x8x256xf32, #tpu.memory_space<vmem>>, vector<1x8x256xf32>
    %22 = vector.shape_cast %21 : vector<1x8x256xf32> to vector<8x256xf32>
    %23 = vector.shape_cast %20 : vector<8x256xf32> to vector<1x8x256xf32>
    tpu.vector_store %arg6[%c0_12, %c0_13, %c0_14], %23 {strides = array<i32>} : memref<1x8x256xf32, #tpu.memory_space<vmem>>, vector<1x8x256xf32>,
    return
  }
  func.func @transform_0(%arg0: i32, %arg1: i32) -> (i32, i32, i32) {
    %c0_i32 = arith.constant 0 : i32
    %c0_i32_0 = arith.constant 0 : i32
    return %arg0, %c0_i32, %arg1 : i32, i32, i32
  }
  func.func @transform_1(%arg0: i32, %arg1: i32) -> (i32, i32) {
    %c0_i32 = arith.constant 0 : i32
    %c0_i32_0 = arith.constant 0 : i32
    %c0_i32_1 = arith.constant 0 : i32
    return %c0_i32, %c0_i32_0 : i32, i32
  }
  func.func @transform_2(%arg0: i32, %arg1: i32) -> (i32, i32) {
    %c0_i32 = arith.constant 0 : i32
    %c0_i32_0 = arith.constant 0 : i32
    %c0_i32_1 = arith.constant 0 : i32
    return %c0_i32, %c0_i32_0 : i32, i32
  }
  func.func @transform_3(%arg0: i32, %arg1: i32) -> (i32, i32) {
    %c0_i32 = arith.constant 0 : i32
    %c0_i32_0 = arith.constant 0 : i32
    %c0_i32_1 = arith.constant 0 : i32
    return %c0_i32, %c0_i32_0 : i32, i32
  }
  func.func @transform_4(%arg0: i32, %arg1: i32) -> (i32, i32, i32) {
    %c0_i32 = arith.constant 0 : i32
    %c0_i32_0 = arith.constant 0 : i32
    return %arg0, %c0_i32, %arg1 : i32, i32, i32
  }
}

</mosaic_0001>

<llo_original>
// kernel: tpu_custom_call.1
$region0: #{tpu_custom_call.1}
  #allocation0 [shape = 'u32[]', space=smem, size = 0x4, offset = 0x4, fixed_abs, tag = 'smem constant byte address 0x4 - core index']
  #allocation1 [shape = 'u32[72,128]{1,0:T(1,128)}', space=vmem, size = 0x9000, scoped, tag = 'internal scratch']
  %s0 = inlined_call_operand.hbm [shape: f32[2,32,256], index: 0, kind: input, shape index: {}]
  %s1 = inlined_call_operand.vmem [shape: f32[32,32], index: 1, kind: input, shape index: {}]
  %s2 = inlined_call_operand.vmem [shape: f32[32,1], index: 2, kind: input, shape index: {}]
  %s3 = inlined_call_operand.hbm [shape: f32[8,32], index: 3, kind: input, shape index: {}]
  %s4 = inlined_call_operand.hbm [shape: f32[2,8,256], index: 4, kind: output, shape index: {}]
  %s5 = sld [smem:[#allocation0]]
  $region57: #{tpu_custom_call.1} parent=0
    _
  %s7 = ssub.s32 1, %s5
  %s8 = scalar_select 0, %s7, %s5
  $region1: #{tpu_custom_call.1} parent=0
    #allocation2 [shape = 'u8[65536]{0}', space=vmem, size = 0x10000, scoped, tag = 'input window, operand 0']
    #allocation3 [shape = 's32[2]{0}', space=sflag, size = 0x8, scoped, tag = 'scoped memory for tpu_custom_call.1']
    #allocation4 [shape = 's32[2]{0}', space=sflag, size = 0x8, scoped, tag = 'scoped memory for tpu_custom_call.1']
    #allocation5 [shape = 'u8[4096]{0}', space=vmem, size = 0x1000, scoped, tag = 'input window, operand 3, single buffered']
    #allocation6 [shape = 's32[1]{0}', space=sflag, size = 0x4, scoped, tag = 'scoped memory for tpu_custom_call.1']
    #allocation7 [shape = 'u8[16384]{0}', space=vmem, size = 0x4000, scoped, tag = 'output window, operand 0']
    %9 = vsyncpa [#allocation3], 0
    %s10 = scalar_lea.sflag [#allocation3], 1
    %11 = vsyncpa %s10, 0
    %12 = vsyncpa [#allocation6], 0
    %13 = vsyncpa [#allocation4], 0
    %s14 = scalar_lea.sflag [#allocation4], 1
    %15 = vsyncpa %s14, 0
    loop: start=0, step=1, limit=4
    $region2: #{tpu_custom_call.1} parent=1 // loop_pre_header
      _
    $region3: #{tpu_custom_call.1} parent=1 // loop_header
      %s17 = sphi 0, %s21
      %p18 = scmp.ge.s32.totalorder %s17, 4
      %s24 = sphi 0, %s36
      %s25 = sphi 0, %s32
      %s26 = sphi 0, %s24
      %s27 = sphi 0, %s25
      %s28 = sphi 0, %s26
      %s29 = sphi 0, %s27
      %s41 = sphi 0, %s43
      %s44 = sphi 0, %s41
      %s45 = sphi 0, %s44
      %s61 = sphi 0, %s45
      %s65 = sphi 0, %s65
      %s67 = sphi 0, %s65
      %s68 = sphi 0, %s67
      %s82 = sphi 0, %s68
      %s86 = sphi 0, %s86
      %s88 = sphi 0, %s86
      %s89 = sphi 0, %s88
      %s103 = sphi 0, %s89
      %s107 = sphi 0, %s107
      %s109 = sphi 0, %s107
      %s110 = sphi 0, %s109
      %s124 = sphi 0, %s110
      %s132 = sphi 0, %s134
      %s135 = sphi 0, %s132
      %s136 = sphi 0, %s135
      %s152 = sphi 0, %s136
    $region4: #{tpu_custom_call.1} parent=1 // loop_header_branch
      %20 = sbr.rel (%p18) target = $region8
    $region5: #{tpu_custom_call.1} parent=1 // loop_body
      %s22 = ssub.s32 %s17, 1
      %s23 = ssub.s32 %s17, 2
      %s30 = sadd.s32 1, %s25
      %p31 = scmp.ge.s32.totalorder %s30, 1
      %s32 = scalar_select %p31, 0, %s30
      %s33 = sadd.s32 1, %s24
      %s34 = scalar_select %p31, %s33, %s24
      %p35 = scmp.ge.s32.totalorder %s34, 2
      %s36 = scalar_select %p35, 0, %s34
      %s37 = ssub.s32 %s24, %s36
      %s38 = ssub.s32 %s25, %s32
      %s39 = sor.u32 %s37, %s38
      %p40 = scmp.eq.s32.totalorder %s39, 0
      %s42 = sadd.s32 %s41, 1
      %s43 = scalar_select %p40, %s41, %s42
      %p46 = pneg %p40
      %p47 = scmp.eq.s32.totalorder %s17, 1
      %p48 = por %p46, %p47
      %p49 = scmp.ne.s32.totalorder %s41, %s44
      %p50 = scmp.eq.s32.totalorder %s17, 0
      %p51 = por %p49, %p50
      %p52 = scmp.ne.s32.totalorder %s41, %s44
      %p53 = scmp.eq.s32.totalorder %s22, 1
      %p54 = por %p52, %p53
      %p55 = scmp.ne.s32.totalorder %s44, %s45
      %p56 = scmp.eq.s32.totalorder %s22, 0
      %p57 = por %p55, %p56
      %p58 = scmp.ne.s32.totalorder %s44, %s45
      %p59 = scmp.eq.s32.totalorder %s23, 1
      %p60 = por %p58, %p59
      %p62 = scmp.ne.s32.totalorder %s45, %s61
      %p63 = scmp.eq.s32.totalorder %s23, 0
      %p64 = por %p62, %p63
      %s66 = sadd.s32 %s65, 1
      %p69 = scmp.eq.s32.totalorder %s17, 1
      %p70 = scmp.ne.s32.totalorder %s65, %s67
      %p71 = scmp.eq.s32.totalorder %s17, 0
      %p72 = por %p70, %p71
      %p73 = scmp.ne.s32.totalorder %s65, %s67
      %p74 = scmp.eq.s32.totalorder %s22, 1
      %p75 = por %p73, %p74
      %p76 = scmp.ne.s32.totalorder %s67, %s68
      %p77 = scmp.eq.s32.totalorder %s22, 0
      %p78 = por %p76, %p77
      %p79 = scmp.ne.s32.totalorder %s67, %s68
      %p80 = scmp.eq.s32.totalorder %s23, 1
      %p81 = por %p79, %p80
      %p83 = scmp.ne.s32.totalorder %s68, %s82
      %p84 = scmp.eq.s32.totalorder %s23, 0
      %p85 = por %p83, %p84
      %s87 = sadd.s32 %s86, 1
      %p90 = scmp.eq.s32.totalorder %s17, 1
      %p91 = scmp.ne.s32.totalorder %s86, %s88
      %p92 = scmp.eq.s32.totalorder %s17, 0
      %p93 = por %p91, %p92
      %p94 = scmp.ne.s32.totalorder %s86, %s88
      %p95 = scmp.eq.s32.totalorder %s22, 1
      %p96 = por %p94, %p95
      %p97 = scmp.ne.s32.totalorder %s88, %s89
      %p98 = scmp.eq.s32.totalorder %s22, 0
      %p99 = por %p97, %p98
      %p100 = scmp.ne.s32.totalorder %s88, %s89
      %p101 = scmp.eq.s32.totalorder %s23, 1
      %p102 = por %p100, %p101
      %p104 = scmp.ne.s32.totalorder %s89, %s103
      %p105 = scmp.eq.s32.totalorder %s23, 0
      %p106 = por %p104, %p105
      %s108 = sadd.s32 %s107, 1
      %p111 = scmp.eq.s32.totalorder %s17, 1
      %p112 = scmp.ne.s32.totalorder %s107, %s109
      %p113 = scmp.eq.s32.totalorder %s17, 0
      %p114 = por %p112, %p113
      %p115 = scmp.ne.s32.totalorder %s107, %s109
      %p116 = scmp.eq.s32.totalorder %s22, 1
      %p117 = por %p115, %p116
      %p118 = scmp.ne.s32.totalorder %s109, %s110
      %p119 = scmp.eq.s32.totalorder %s22, 0
      %p120 = por %p118, %p119
      %p121 = scmp.ne.s32.totalorder %s109, %s110
      %p122 = scmp.eq.s32.totalorder %s23, 1
      %p123 = por %p121, %p122
      %p125 = scmp.ne.s32.totalorder %s110, %s124
      %p126 = scmp.eq.s32.totalorder %s23, 0
      %p127 = por %p125, %p126
      %s128 = ssub.s32 %s24, %s36
      %s129 = ssub.s32 %s25, %s32
      %s130 = sor.u32 %s128, %s129
      %p131 = scmp.eq.s32.totalorder %s130, 0
      %s133 = sadd.s32 %s132, 1
      %s134 = scalar_select %p131, %s132, %s133
      %p137 = pneg %p131
      %p138 = scmp.eq.s32.totalorder %s17, 1
      %p139 = por %p137, %p138
      %p140 = scmp.ne.s32.totalorder %s132, %s135
      %p141 = scmp.eq.s32.totalorder %s17, 0
      %p142 = por %p140, %p141
      %p143 = scmp.ne.s32.totalorder %s132, %s135
      %p144 = scmp.eq.s32.totalorder %s22, 1
      %p145 = por %p143, %p144
      %p146 = scmp.ne.s32.totalorder %s135, %s136
      %p147 = scmp.eq.s32.totalorder %s22, 0
      %p148 = por %p146, %p147
      %p149 = scmp.ne.s32.totalorder %s135, %s136
      %p150 = scmp.eq.s32.totalorder %s23, 1
      %p151 = por %p149, %p150
      %p153 = scmp.ne.s32.totalorder %s136, %s152
      %p154 = scmp.eq.s32.totalorder %s23, 0
      %p155 = por %p153, %p154
      %p156 = scmp.le.s32.totalorder 1, %s17
      %p157 = scmp.lt.s32.totalorder %s17, 3
      %p158 = pnand %p156, %p157
      %p159 = pneg %p158
      // Predicated region
      $region9: #{tpu_custom_call.1} parent=5 // pred_check
        _
      $region10: #{tpu_custom_call.1} parent=5 // pred_check_branch
        %161 = sbr.rel (%p158) target = $region12
      $region11: #{tpu_custom_call.1} parent=5 // pred_region
        %s162 = ssub.s32 %s17, 1
        // Predicated region
        $region13: #{tpu_custom_call.1} parent=11 // pred_check
          %p163 = pneg %p78
        $region14: #{tpu_custom_call.1} parent=11 // pred_check_branch
          %165 = sbr.rel (%p163) target = $region16
        $region15: #{tpu_custom_call.1} parent=11 // pred_region
          _
        $region16: #{tpu_custom_call.1} parent=11 // pred_fallthru
          _
        // Predicated region
        $region17: #{tpu_custom_call.1} parent=11 // pred_check
          %p166 = pneg %p99
        $region18: #{tpu_custom_call.1} parent=11 // pred_check_branch
          %168 = sbr.rel (%p166) target = $region20
        $region19: #{tpu_custom_call.1} parent=11 // pred_region
          _
        $region20: #{tpu_custom_call.1} parent=11 // pred_fallthru
          _
        // Predicated region
        $region21: #{tpu_custom_call.1} parent=11 // pred_check
          %p169 = pneg %p120
        $region22: #{tpu_custom_call.1} parent=11 // pred_check_branch
          %171 = sbr.rel (%p169) target = $region24
        $region23: #{tpu_custom_call.1} parent=11 // pred_region
          %173 = vsyncadd [#allocation6], 0
          %s175 = sshll.u32 %s3, 4
          %s176 = int_to_ptr.hbm [resolvable:$true] %s175
          %s177 = sshll.u32 [#allocation5], 4
          %s178 = int_to_ptr.vmem [resolvable:$true] %s177
          %180 = dma.hbm_to_vmem [thread:$0]  %s176, 128, %s178, [#allocation6]
        $region24: #{tpu_custom_call.1} parent=11 // pred_fallthru
          _
      $region12: #{tpu_custom_call.1} parent=5 // pred_fallthru
        _
      %p181 = scmp.lt.s32.totalorder %s17, 2
      // Predicated region
      $region25: #{tpu_custom_call.1} parent=5 // pred_check
        %p182 = pneg %p181
      $region26: #{tpu_custom_call.1} parent=5 // pred_check_branch
        %184 = sbr.rel (%p182) target = $region28
      $region27: #{tpu_custom_call.1} parent=5 // pred_region
        // Predicated region
        $region29: #{tpu_custom_call.1} parent=27 // pred_check
          %p185 = pneg %p51
        $region30: #{tpu_custom_call.1} parent=27 // pred_check_branch
          %187 = sbr.rel (%p185) target = $region32
        $region31: #{tpu_custom_call.1} parent=27 // pred_region
          %s188 = sand.u32 %s41, 1
          %s189 = scalar_lea.sflag [#allocation3], %s188
          %s190 = sand.u32 %s41, 1
          %s191 = smul.addr %s190, 64
          %s192 = scalar_lea.vmem [#allocation2], %s191
          %s193 = smul.u32 2, %s25
          %195 = vsyncadd %s189, 0
          %s196 = smul.addr %s24, 8
          %s197 = sadd.s32 %s193, %s196
          %s198 = smul.addr %s197, 8
          %s199 = scalar_lea.hbm %s0, %s198
          %s200 = sshll.u32 %s199, 4
          %s201 = int_to_ptr.hbm [resolvable:$true] %s200
          %s202 = sshll.u32 %s192, 4
          %s203 = int_to_ptr.vmem [resolvable:$true] %s202
          %208 = dma.hbm_to_vmem [thread:$0]  %s201, 1024, %s203, %s189, 256, 256, 16
        $region32: #{tpu_custom_call.1} parent=27 // pred_fallthru
          _
      $region28: #{tpu_custom_call.1} parent=5 // pred_fallthru
        _
      %p209 = scmp.le.s32.totalorder 1, %s17
      %p210 = scmp.lt.s32.totalorder %s17, 3
      %p211 = pnand %p209, %p210
      %p212 = pneg %p211
      // Predicated region
      $region33: #{tpu_custom_call.1} parent=5 // pred_check
        _
      $region34: #{tpu_custom_call.1} parent=5 // pred_check_branch
        %214 = sbr.rel (%p211) target = $region36
      $region35: #{tpu_custom_call.1} parent=5 // pred_region
        %s215 = ssub.s32 %s17, 1
        %s216 = sand.u32 %s44, 1
        %s217 = scalar_lea.sflag [#allocation3], %s216
        %s218 = sand.u32 %s44, 1
        %s219 = smul.addr %s218, 64
        %s220 = scalar_lea.vmem [#allocation2], %s219
        // Predicated region
        $region37: #{tpu_custom_call.1} parent=35 // pred_check
          %p221 = pneg %p57
        $region38: #{tpu_custom_call.1} parent=35 // pred_check_branch
          %223 = sbr.rel (%p221) target = $region40
        $region39: #{tpu_custom_call.1} parent=35 // pred_region
          %225 = dma.done %s217, 1024
        $region40: #{tpu_custom_call.1} parent=35 // pred_fallthru
          _
        // Predicated region
        $region41: #{tpu_custom_call.1} parent=35 // pred_check
          %p226 = pneg %p120
        $region42: #{tpu_custom_call.1} parent=35 // pred_check_branch
          %228 = sbr.rel (%p226) target = $region44
        $region43: #{tpu_custom_call.1} parent=35 // pred_region
          %230 = dma.done [#allocation6], 128
        $region44: #{tpu_custom_call.1} parent=35 // pred_fallthru
          _
        %s231 = sand.u32 %s44, 1
        %s232 = scalar_lea.sflag [#allocation3], %s231
        %s233 = sand.u32 %s44, 1
        %s234 = smul.addr %s233, 64
        %s235 = scalar_lea.vmem [#allocation2], %s234
        %p236 = pneg %p57
        %p237 = pneg %p54
        %p238 = pneg %p78
        %p239 = pneg %p75
        %p240 = pneg %p99
        %p241 = pneg %p96
        %p242 = pneg %p120
        %p243 = pneg %p117
        %p244 = pneg %p148
        %p245 = pneg %p145
        %s246 = sand.u32 %s135, 1
        %s247 = scalar_lea.sflag [#allocation4], %s246
        %s248 = sand.u32 %s135, 1
        %s249 = smul.addr %s248, 16
        %s250 = scalar_lea.vmem [#allocation7], %s249
        %s251 = smul.u32 2, %s27
        %s252 = smul.u32 2, %s27
        %v253 = vld [vmem:[%s220] sm:$0xff]
        %v254 = vld [vmem:[%s220 + $0x8] sm:$0xff]
        %v255 = vld [vmem:[%s220 + $0x10] sm:$0xff]
        %v256 = vld [vmem:[%s220 + $0x18] sm:$0xff]
        %v257 = vld [vmem:[%s220 + $0x20] sm:$0xff]
        %v258 = vld [vmem:[%s220 + $0x28] sm:$0xff]
        %v259 = vld [vmem:[%s220 + $0x30] sm:$0xff]
        %v260 = vld [vmem:[%s220 + $0x38] sm:$0xff]
        %v261 = vld [vmem:[%s1] sm:$0xff]
        %v262 = vld [vmem:[%s1 + $0x8] sm:$0xff]
        %v263 = vld [vmem:[%s1 + $0x10] sm:$0xff]
        %v264 = vld [vmem:[%s1 + $0x18] sm:$0xff]
        %v265 = vld [vmem:[%s2] sm:$0xff]
        %v266 = vld [vmem:[%s2 + $0x8] sm:$0xff]
        %v267 = vld [vmem:[%s2 + $0x10] sm:$0xff]
        %v268 = vld [vmem:[%s2 + $0x18] sm:$0xff]
        %270 = vset.pattern.permute.xlu0 0
        %271 = vperm.xlu0 %270, %v265
        %v272 = vpop.permute.xlu0 %271
        %275 = vset.pattern.permute.xlu0 0
        %276 = vperm.xlu0 %275, %v266
        %v277 = vpop.permute.xlu0 %276
        %280 = vset.pattern.permute.xlu0 0
        %281 = vperm.xlu0 %280, %v267
        %v282 = vpop.permute.xlu0 %281
        %285 = vset.pattern.permute.xlu0 0
        %286 = vperm.xlu0 %285, %v268
        %v287 = vpop.permute.xlu0 %286
        %vm289 = vcmask 261120
        %v291 = vsel %vm289, %v261, 0
        %v294 = vsel %vm289, %v262, 0
        %v297 = vsel %vm289, %v263, 0
        %v300 = vsel %vm289, %v264, 0
        %302 = vmatpush.msra.mxu0 0.0
        %303 = vmatpush.msra.mxu0 0.0
        %304 = vmatpush.msra.mxu0 0.0
        %305 = vmatpush.msra.mxu0 0.0
        %306 = vmatpush.msra.mxu0 0.0
        %307 = vmatpush.msra.mxu0 0.0
        %308 = vmatpush.msra.mxu0 0.0
        %309 = vmatpush.msra.mxu0 0.0
        %310 = vmatpush.msra.mxu0 0.0
        %311 = vmatpush.msra.mxu0 0.0
        %312 = vmatpush.msra.mxu0 0.0
        %313 = vmatpush.msra.mxu0 0.0
        %314 = vmatpush.msra.mxu0 %v259
        %315 = vmatpush.msra.mxu0 %v257
        %316 = vmatpush.msra.mxu0 %v255
        %317 = vmatpush.msra.mxu0 %v253
        %318 = vmatmul.f32.gmra.mxu0 %v291
        %v319 = vpop.f32.mrf.mxu0
        %v320 = vadd.f32 %v272, %v319
        %321 = vmatmul.f32.gmra.mxu0 %v294
        %v322 = vpop.f32.mrf.mxu0
        %v323 = vadd.f32 %v277, %v322
        %324 = vmatmul.f32.gmra.mxu0 %v297
        %v325 = vpop.f32.mrf.mxu0
        %v326 = vadd.f32 %v282, %v325
        %327 = vmatmul.f32.gmra.mxu0 %v300
        %v328 = vpop.f32.mrf.mxu0
        %v329 = vadd.f32 %v287, %v328
        %330 = vdwg.mxu0
        %331 = vmatpush.msra.mxu0 0.0
        %332 = vmatpush.msra.mxu0 0.0
        %333 = vmatpush.msra.mxu0 0.0
        %334 = vmatpush.msra.mxu0 0.0
        %335 = vmatpush.msra.mxu0 0.0
        %336 = vmatpush.msra.mxu0 0.0
        %337 = vmatpush.msra.mxu0 0.0
        %338 = vmatpush.msra.mxu0 0.0
        %339 = vmatpush.msra.mxu0 0.0
        %340 = vmatpush.msra.mxu0 0.0
        %341 = vmatpush.msra.mxu0 0.0
        %342 = vmatpush.msra.mxu0 0.0
        %343 = vmatpush.msra.mxu0 %v260
        %344 = vmatpush.msra.mxu0 %v258
        %345 = vmatpush.msra.mxu0 %v256
        %346 = vmatpush.msra.mxu0 %v254
        %347 = vmatmul.f32.gmra.mxu0 %v291
        %v348 = vpop.f32.mrf.mxu0
        %v349 = vadd.f32 %v272, %v348
        %350 = vmatmul.f32.gmra.mxu0 %v294
        %v351 = vpop.f32.mrf.mxu0
        %v352 = vadd.f32 %v277, %v351
        %353 = vmatmul.f32.gmra.mxu0 %v297
        %v354 = vpop.f32.mrf.mxu0
        %v355 = vadd.f32 %v282, %v354
        %356 = vmatmul.f32.gmra.mxu0 %v300
        %v357 = vpop.f32.mrf.mxu0
        %v358 = vadd.f32 %v287, %v357
        %359 = vdwg.mxu0
        %v360 = vmax.f32 %v320, 0.0
        %v361 = vmax.f32 %v349, 0.0
        %v362 = vmax.f32 %v323, 0.0
        %v363 = vmax.f32 %v352, 0.0
        %v364 = vmax.f32 %v326, 0.0
        %v365 = vmax.f32 %v355, 0.0
        %v366 = vmax.f32 %v329, 0.0
        %v367 = vmax.f32 %v358, 0.0
        %v368 = vld [vmem:[#allocation5] sm:$0xff]
        %v370 = vsel %vm289, %v368, 0
        %372 = vmatpush.msra.mxu0 0.0
        %373 = vmatpush.msra.mxu0 0.0
        %374 = vmatpush.msra.mxu0 0.0
        %375 = vmatpush.msra.mxu0 0.0
        %376 = vmatpush.msra.mxu0 0.0
        %377 = vmatpush.msra.mxu0 0.0
        %378 = vmatpush.msra.mxu0 0.0
        %379 = vmatpush.msra.mxu0 0.0
        %380 = vmatpush.msra.mxu0 0.0
        %381 = vmatpush.msra.mxu0 0.0
        %382 = vmatpush.msra.mxu0 0.0
        %383 = vmatpush.msra.mxu0 0.0
        %384 = vmatpush.msra.mxu0 %v366
        %385 = vmatpush.msra.mxu0 %v364
        %386 = vmatpush.msra.mxu0 %v362
        %387 = vmatpush.msra.mxu0 %v360
        %388 = vmatmul.f32.gmra.mxu0 %v370
        %v389 = vpop.f32.mrf.mxu0
        %v390 = vadd.f32 0.0, %v389
        %391 = vdwg.mxu0
        %392 = vmatpush.msra.mxu0 0.0
        %393 = vmatpush.msra.mxu0 0.0
        %394 = vmatpush.msra.mxu0 0.0
        %395 = vmatpush.msra.mxu0 0.0
        %396 = vmatpush.msra.mxu0 0.0
        %397 = vmatpush.msra.mxu0 0.0
        %398 = vmatpush.msra.mxu0 0.0
        %399 = vmatpush.msra.mxu0 0.0
        %400 = vmatpush.msra.mxu0 0.0
        %401 = vmatpush.msra.mxu0 0.0
        %402 = vmatpush.msra.mxu0 0.0
        %403 = vmatpush.msra.mxu0 0.0
        %404 = vmatpush.msra.mxu0 %v367
        %405 = vmatpush.msra.mxu0 %v365
        %406 = vmatpush.msra.mxu0 %v363
        %407 = vmatpush.msra.mxu0 %v361
        %408 = vmatmul.f32.gmra.mxu0 %v370
        %v409 = vpop.f32.mrf.mxu0
        %v410 = vadd.f32 0.0, %v409
        %411 = vdwg.mxu0
        %v412 = vrot.slane %v390, 4
        %v413 = vmax.f32 %v390, %v412
        %v414 = vrot.slane %v413, 2
        %v415 = vmax.f32 %v413, %v414
        %v416 = vrot.slane %v415, 1
        %v417 = vmax.f32 %v415, %v416
        %v418 = vrot.slane %v410, 4
        %v419 = vmax.f32 %v410, %v418
        %v420 = vrot.slane %v419, 2
        %v421 = vmax.f32 %v419, %v420
        %v422 = vrot.slane %v421, 1
        %v423 = vmax.f32 %v421, %v422
        %v424 = vsub.f32 %v390, %v417
        %v425 = vsub.f32 %v410, %v423
        %v426 = vmul.f32 %v424, 1.442695
        %v427 = vpow.pop %v426
        %v428 = vmul.f32 %v425, 1.442695
        %v429 = vpow.pop %v428
        %v430 = vrot.slane %v427, 4
        %v431 = vadd.f32 %v427, %v430
        %v432 = vrot.slane %v431, 2
        %v433 = vadd.f32 %v431, %v432
        %v434 = vrot.slane %v433, 1
        %v435 = vadd.f32 %v433, %v434
        %v436 = vrot.slane %v429, 4
        %v437 = vadd.f32 %v429, %v436
        %v438 = vrot.slane %v437, 2
        %v439 = vadd.f32 %v437, %v438
        %v440 = vrot.slane %v439, 1
        %v441 = vadd.f32 %v439, %v440
        %v442 = vrcp.pop %v435
        %v443 = vmul.f32 %v435, %v442
        %v444 = vsub.f32 1.0, %v443
        %v445 = vmul.f32 %v442, %v444
        %v446 = vadd.f32 %v442, %v445
        %vm447 = vweird.f32 %v435
        %vm448 = vweird.f32 %v442
        %vm449 = vmor %vm447, %vm448
        %v450 = vsel %vm449, %v442, %v446
        %v451 = vand.u32 2147483647, %v435
        %vm452 = vcmp.eq.f32.partialorder %v451, 8.507059e+37
        %v453 = vand.u32 %v435, 2147483648
        %v454 = vor.u32 1.1754944e-38, %v453
        %v455 = vsel %vm452, %v454, %v450
        %v456 = vrcp.pop %v441
        %v457 = vmul.f32 %v441, %v456
        %v458 = vsub.f32 1.0, %v457
        %v459 = vmul.f32 %v456, %v458
        %v460 = vadd.f32 %v456, %v459
        %vm461 = vweird.f32 %v441
        %vm462 = vweird.f32 %v456
        %vm463 = vmor %vm461, %vm462
        %v464 = vsel %vm463, %v456, %v460
        %v465 = vand.u32 2147483647, %v441
        %vm466 = vcmp.eq.f32.partialorder %v465, 8.507059e+37
        %v467 = vand.u32 %v441, 2147483648
        %v468 = vor.u32 1.1754944e-38, %v467
        %v469 = vsel %vm466, %v468, %v464
        %v470 = vmul.f32 %v427, %v455
        %v471 = vmul.f32 %v429, %v469
        %472 = vst [vmem:[%s250] sm:$0xff] %v470
        %473 = vst [vmem:[%s250 + $0x8] sm:$0xff] %v471
        %s474 = sand.u32 %s135, 1
        %s475 = scalar_lea.sflag [#allocation4], %s474
        %s476 = sand.u32 %s135, 1
        %s477 = smul.addr %s476, 16
        %s478 = scalar_lea.vmem [#allocation7], %s477
        // Predicated region
        $region45: #{tpu_custom_call.1} parent=35 // pred_check
          %p479 = pneg %p145
        $region46: #{tpu_custom_call.1} parent=35 // pred_check_branch
          %481 = sbr.rel (%p479) target = $region48
        $region47: #{tpu_custom_call.1} parent=35 // pred_region
          %s482 = smul.u32 2, %s27
          %484 = vsyncadd %s475, 0
          %s485 = smul.addr %s26, 2
          %s486 = sadd.s32 %s482, %s485
          %s487 = smul.addr %s486, 8
          %s488 = scalar_lea.hbm %s4, %s487
          %s490 = sshll.u32 %s478, 4
          %s491 = int_to_ptr.vmem [resolvable:$true] %s490
          %s492 = sshll.u32 %s488, 4
          %s493 = int_to_ptr.hbm [resolvable:$true] %s492
          %495 = dma.vmem_to_hbm [thread:$0]  %s491, 256, %s493, %s475
        $region48: #{tpu_custom_call.1} parent=35 // pred_fallthru
          _
      $region36: #{tpu_custom_call.1} parent=5 // pred_fallthru
        _
      %p496 = scmp.le.s32.totalorder 2, %s17
      // Predicated region
      $region49: #{tpu_custom_call.1} parent=5 // pred_check
        %p497 = pneg %p496
      $region50: #{tpu_custom_call.1} parent=5 // pred_check_branch
        %499 = sbr.rel (%p497) target = $region52
      $region51: #{tpu_custom_call.1} parent=5 // pred_region
        %s500 = ssub.s32 %s17, 2
        // Predicated region
        $region53: #{tpu_custom_call.1} parent=51 // pred_check
          %p501 = pneg %p151
        $region54: #{tpu_custom_call.1} parent=51 // pred_check_branch
          %503 = sbr.rel (%p501) target = $region56
        $region55: #{tpu_custom_call.1} parent=51 // pred_region
          %s504 = sand.u32 %s136, 1
          %s505 = scalar_lea.sflag [#allocation4], %s504
          %s506 = sand.u32 %s136, 1
          %s507 = smul.addr %s506, 16
          %s508 = scalar_lea.vmem [#allocation7], %s507
          %510 = dma.done %s505, 256
        $region56: #{tpu_custom_call.1} parent=51 // pred_fallthru
          _
      $region52: #{tpu_custom_call.1} parent=5 // pred_fallthru
        _
    $region6: #{tpu_custom_call.1} parent=1 // loop_footer
      %s21 = sadd.s32 1, %s17
    $region7: #{tpu_custom_call.1} parent=1 // loop_footer_branch
      %16 = sbr.rel target = $region3
    $region8: #{tpu_custom_call.1} parent=1 // loop_exit
      _
    %511 = vsyncpa [#allocation3], 1
    %s512 = scalar_lea.sflag [#allocation3], 1
    %513 = vsyncpa %s512, 1
    %514 = vsyncpa [#allocation6], 1
    %515 = vsyncpa [#allocation4], 1
    %s516 = scalar_lea.sflag [#allocation4], 1
    %517 = vsyncpa %s516, 1

</llo_original>
